<compile_context>
chip_gen: v7x
topology: tpu7x:2x2x1
jax: 0.10.0
libtpu: 0.0.40
codegen_flags: <defaults>
</compile_context>

<pallas_src>
import functools

import jax
import jax.numpy as jnp
from jax import lax
from jax.experimental import pallas as pl
from jax.experimental.pallas import tpu as pltpu


def _i32(x):
    """Reinterpret a uint32 literal as an int32 Python int (two's complement)."""
    x &= 0xFFFFFFFF
    return x - (1 << 32) if x >= (1 << 31) else x


_GOLD = _i32(0x9E3779B9)
_C1 = _i32(0x7FEB352D)
_C2 = _i32(0x846CA68B)


def _addnorm_kernel(seed_ref, x_ref, s_ref, g_ref, b_ref, o_ref, *,
                    eps, rate, training, inv_h):
    """One grid step processes a (row_tile, H) slab of flattened rows."""
    x = x_ref[...].astype(jnp.float32)
    s = s_ref[...].astype(jnp.float32)

    if training and rate > 0.0:
        # Inverted dropout (matches torch.nn.Dropout train-mode semantics; the
        # realized mask pattern is implementation-defined).
        # Counter-based hash PRNG: key = seed, counter = global flat element
        # index.  Pure int32 VPU ops -> lowers on Mosaic and in interpret mode.
        rt, h_dim = s_ref.shape
        row0 = pl.program_id(0) * jnp.int32(rt)
        r = lax.broadcasted_iota(jnp.int32, (rt, h_dim), 0)
        c = lax.broadcasted_iota(jnp.int32, (rt, h_dim), 1)
        idx = (row0 + r) * jnp.int32(h_dim) + c

        h = idx ^ (seed_ref[0] * jnp.int32(_GOLD))
        # lowbias32-style mix; masks after arithmetic >> emulate logical shift.
        h = (h ^ ((h >> 16) & 0xFFFF)) * jnp.int32(_C1)
        h = (h ^ ((h >> 15) & 0x1FFFF)) * jnp.int32(_C2)
        h = h ^ ((h >> 16) & 0xFFFF)

        # Top-ish 24 bits -> uniform in [0, 1).  P(keep) = 1 - rate.
        u = ((h >> 8) & 0xFFFFFF).astype(jnp.float32) * jnp.float32(2.0 ** -24)
        keep = u >= jnp.float32(rate)
        s = jnp.where(keep, s * jnp.float32(1.0 / (1.0 - rate)), 0.0)

    y = x + s

    # Fused single-pass mean / biased variance (sum & sum-of-squares in one sweep).
    sum_y = jnp.sum(y, axis=-1, keepdims=True)
    sum_y2 = jnp.sum(y * y, axis=-1, keepdims=True)
    mean = sum_y * inv_h
    var = jnp.maximum(sum_y2 * inv_h - mean * mean, 0.0)
    inv = lax.rsqrt(var + eps)

    # Hoisted affine params, folded into a single per-row/column scale.
    g = g_ref[...].astype(jnp.float32)
    b = b_ref[...].astype(jnp.float32)
    o_ref[...] = ((y - mean) * (inv * g) + b).astype(o_ref.dtype)


def _vmem_capacity_bytes():
    try:
        return int(pltpu.get_tpu_info().vmem_capacity_bytes)
    except Exception:
        return 64 * 1024 * 1024  # conservative (v7x per-TC physical VMEM)


def add_norm(x, sublayer, gamma, beta, *, seed=0, dropout_rate=0.1,
             training=False, eps=1e-5, row_tile=None):
    """AddNorm forward: LayerNorm(x + dropout(sublayer)).

    x, sublayer: [B, S, H]; gamma, beta: [H].
    """
    B, S, H = x.shape
    rows = B * S
    itemsize = jnp.dtype(x.dtype).itemsize
    sub_mult = 16 if itemsize == 2 else 8  # sublane packing granularity

    # --- tile sizing: fill ~50% of this generation's VMEM with the
    # double-buffered working set (x, sublayer, out -> 3 streams x 2 buffers).
    vmem_cap = _vmem_capacity_bytes()
    budget = vmem_cap // 2
    if row_tile is None:
        per_row = 6 * H * itemsize
        row_tile = budget // max(per_row, 1)
        row_tile = min(row_tile, 1024)
        row_tile = max(sub_mult, (row_tile // sub_mult) * sub_mult)
    else:
        row_tile = max(sub_mult, (row_tile // sub_mult) * sub_mult)

    # Never tile larger than the (padded) problem.
    min_padded_rows = -(-rows // sub_mult) * sub_mult
    row_tile = min(row_tile, min_padded_rows)

    n_tiles = -(-rows // row_tile)
    padded_rows = n_tiles * row_tile

    x2 = x.reshape(rows, H)
    s2 = sublayer.reshape(rows, H)
    if padded_rows != rows:
        pad = padded_rows - rows
        x2 = jnp.pad(x2, ((0, pad), (0, 0)))
        s2 = jnp.pad(s2, ((0, pad), (0, 0)))
    g2 = gamma.reshape(1, H)
    b2 = beta.reshape(1, H)
    seed_arr = jnp.asarray([seed], dtype=jnp.int32)

    # Explicit scoped-VMEM limit so large tiles are accepted on v5e (16 MiB
    # default) while leaving headroom on v7x (64 MiB physical).
    working = 6 * row_tile * H * itemsize + 8 * H * 4 + (1 << 16)
    vmem_limit = max(working + (4 << 20), 32 << 20)
    vmem_limit = min(vmem_limit, vmem_cap * 3 // 4)
    vmem_limit = max(vmem_limit, working + (1 << 20))

    kernel = functools.partial(
        _addnorm_kernel,
        eps=float(eps),
        rate=float(dropout_rate),
        training=bool(training),
        inv_h=float(1.0 / H),
    )

    # TODO(synk): for H < 128 the output last dim is not lane-dense (masked
    # stores); a k-row fold into a (row_tile/k, k*H) slab would fix that but is
    # irrelevant for typical transformer H >= 128.
    out = pl.pallas_call(
        kernel,
        out_shape=jax.ShapeDtypeStruct((padded_rows, H), x.dtype),
        grid_spec=pltpu.PrefetchScalarGridSpec(
            num_scalar_prefetch=1,            # RNG seed lands in SMEM
            grid=(n_tiles,),
            in_specs=[
                pl.BlockSpec((row_tile, H), lambda i, seed: (i, 0)),  # x
                pl.BlockSpec((row_tile, H), lambda i, seed: (i, 0)),  # sublayer
                pl.BlockSpec((1, H), lambda i, seed: (0, 0)),         # gamma
                pl.BlockSpec((1, H), lambda i, seed: (0, 0)),         # beta
            ],
            out_specs=pl.BlockSpec((row_tile, H), lambda i, seed: (i, 0)),
        ),
        compiler_params=pltpu.CompilerParams(
            dimension_semantics=("parallel",),
            vmem_limit_bytes=int(vmem_limit)),
    )(seed_arr, x2, s2, g2, b2)

    if padded_rows != rows:
        out = out[:rows]
    return out.reshape(B, S, H)


def _reference(x, sub, gamma, beta, eps=1e-5):
    y = x + sub
    mean = jnp.mean(y, axis=-1, keepdims=True)
    var = jnp.mean((y - mean) ** 2, axis=-1, keepdims=True)
    return (y - mean) / jnp.sqrt(var + eps) * gamma + beta


if __name__ == "__main__":
    key = jax.random.PRNGKey(0)
    kx, ks, kg, kb = jax.random.split(key, 4)

    B, S, H = 2, 8, 32
    x = jax.random.normal(kx, (B, S, H), dtype=jnp.float32)
    sub = jax.random.normal(ks, (B, S, H), dtype=jnp.float32)
    gamma = jax.random.normal(kg, (H,), dtype=jnp.float32)
    beta = jax.random.normal(kb, (H,), dtype=jnp.float32)

    # Eval-mode run (dropout = identity), matching module.eval() semantics.
    out = add_norm(x, sub, gamma, beta, dropout_rate=0.1, training=False)
    out = jax.block_until_ready(out)
    ref = _reference(x, sub, gamma, beta)
    assert jnp.allclose(out, ref, atol=1e-4, rtol=1e-4), "mismatch vs reference"

    # Shape that is NOT a multiple of the sublane granularity -> exercises padding.
    B2, S2 = 3, 7
    x2 = jax.random.normal(kx, (B2, S2, H), dtype=jnp.float32)
    s2 = jax.random.normal(ks, (B2, S2, H), dtype=jnp.float32)
    out2 = jax.block_until_ready(
        add_norm(x2, s2, gamma, beta, dropout_rate=0.1, training=False))
    ref2 = _reference(x2, s2, gamma, beta)
    assert jnp.allclose(out2, ref2, atol=1e-4, rtol=1e-4), "padded-path mismatch"

    # Training-mode smoke test (dropout mask is implementation-defined; just
    # check the path runs and produces finite values, and that roughly the
    # expected fraction of sublayer entries survive).
    out_tr = jax.block_until_ready(
        add_norm(x, sub, gamma, beta, seed=123, dropout_rate=0.5, training=True))
    assert bool(jnp.all(jnp.isfinite(out_tr))), "non-finite training output"

    print("KERNEL_OK")
</pallas_src>

<mosaic_0001>
module attributes {stable_mosaic.version = 11 : i64} {
  func.func @_addnorm_kernel(%arg0: i32, %arg1: memref<1xi32, #tpu.memory_space<smem>>, %arg2: memref<16x32xf32, #tpu.memory_space<vmem>>, %arg3: memref<16x32xf32, #tpu.memory_space<vmem>>, %arg4: memref<1x32xf32, #tpu.memory_space<vmem>>, %arg5: memref<1x32xf32, #tpu.memory_space<vmem>>, %arg6: memref<16x32xf32, #tpu.memory_space<vmem>>) attributes {dimension_semantics = [#tpu.dimension_semantics<parallel>], iteration_bounds = array<i64: 1>, scalar_prefetch = 1 : i64, scratch_operands = 0 : i64, tpu.core_type = #tpu.core_type<tc>, window_params = [{transform_indices = @transform_0, window_bounds = array<i64: 16, 32>}, {transform_indices = @transform_1, window_bounds = array<i64: 16, 32>}, {pipeline_mode = #tpu.pipeline_mode<synchronous>, transform_indices = @transform_2, window_bounds = array<i64: 1, 32>}, {pipeline_mode = #tpu.pipeline_mode<synchronous>, transform_indices = @transform_3, window_bounds = array<i64: 1, 32>}, {transform_indices = @transform_4, window_bounds = array<i64: 16, 32>}]} {
    %c0 = arith.constant 0 : index
    %c0_0 = arith.constant 0 : index
    %0 = vector.load %arg2[%c0, %c0_0] : memref<16x32xf32, #tpu.memory_space<vmem>>, vector<16x32xf32>
    %c0_1 = arith.constant 0 : index
    %c0_2 = arith.constant 0 : index
    %1 = vector.load %arg3[%c0_1, %c0_2] : memref<16x32xf32, #tpu.memory_space<vmem>>, vector<16x32xf32>
    %2 = arith.addf %0, %1 : vector<16x32xf32>
    %cst = arith.constant dense<0.000000e+00> : vector<16xf32>
    %3 = vector.multi_reduction <add>, %2, %cst [1] : vector<16x32xf32> to vector<16xf32>
    %4 = vector.shape_cast %3 : vector<16xf32> to vector<16x1xf32>
    %5 = arith.mulf %2, %2 : vector<16x32xf32>
    %cst_3 = arith.constant dense<0.000000e+00> : vector<16xf32>
    %6 = vector.multi_reduction <add>, %5, %cst_3 [1] : vector<16x32xf32> to vector<16xf32>
    %7 = vector.shape_cast %6 : vector<16xf32> to vector<16x1xf32>
    %cst_4 = arith.constant 3.125000e-02 : f32
    %8 = vector.broadcast %cst_4 : f32 to vector<16x1xf32>
    %9 = arith.mulf %4, %8 : vector<16x1xf32>
    %cst_5 = arith.constant 3.125000e-02 : f32
    %10 = vector.broadcast %cst_5 : f32 to vector<16x1xf32>
    %11 = arith.mulf %7, %10 : vector<16x1xf32>
    %12 = arith.mulf %9, %9 : vector<16x1xf32>
    %13 = arith.subf %11, %12 : vector<16x1xf32>
    %cst_6 = arith.constant 0.000000e+00 : f32
    %14 = vector.broadcast %cst_6 : f32 to vector<16x1xf32>
    %15 = arith.maximumf %13, %14 : vector<16x1xf32>
    %cst_7 = arith.constant 9.99999974E-6 : f32
    %16 = vector.broadcast %cst_7 : f32 to vector<16x1xf32>
    %17 = arith.addf %15, %16 : vector<16x1xf32>
    %18 = math.rsqrt %17 : vector<16x1xf32>
    %c0_8 = arith.constant 0 : index
    %c0_9 = arith.constant 0 : index
    %19 = vector.load %arg4[%c0_8, %c0_9] : memref<1x32xf32, #tpu.memory_space<vmem>>, vector<1x32xf32>
    %c0_10 = arith.constant 0 : index
    %c0_11 = arith.constant 0 : index
    %20 = vector.load %arg5[%c0_10, %c0_11] : memref<1x32xf32, #tpu.memory_space<vmem>>, vector<1x32xf32>
    %21 = vector.broadcast %9 : vector<16x1xf32> to vector<16x32xf32>
    %22 = arith.subf %2, %21 : vector<16x32xf32>
    %23 = vector.broadcast %18 : vector<16x1xf32> to vector<16x32xf32>
    %24 = vector.broadcast %19 : vector<1x32xf32> to vector<16x32xf32>
    %25 = arith.mulf %23, %24 : vector<16x32xf32>
    %26 = arith.mulf %22, %25 : vector<16x32xf32>
    %27 = vector.broadcast %20 : vector<1x32xf32> to vector<16x32xf32>
    %28 = arith.addf %26, %27 : vector<16x32xf32>
    %c0_12 = arith.constant 0 : index
    %c0_13 = arith.constant 0 : index
    %29 = vector.load %arg6[%c0_12, %c0_13] : memref<16x32xf32, #tpu.memory_space<vmem>>, vector<16x32xf32>
    tpu.vector_store %arg6[%c0_12, %c0_13], %28 {strides = array<i32>} : memref<16x32xf32, #tpu.memory_space<vmem>>, vector<16x32xf32>,
    return
  }
  func.func @transform_0(%arg0: i32, %arg1: memref<1xi32, #tpu.memory_space<smem>>) -> (i32, i32) {
    %c0_i32 = arith.constant 0 : i32
    %c0_i32_0 = arith.constant 0 : i32
    return %arg0, %c0_i32 : i32, i32
  }
  func.func @transform_1(%arg0: i32, %arg1: memref<1xi32, #tpu.memory_space<smem>>) -> (i32, i32) {
    %c0_i32 = arith.constant 0 : i32
    %c0_i32_0 = arith.constant 0 : i32
    return %arg0, %c0_i32 : i32, i32
  }
  func.func @transform_2(%arg0: i32, %arg1: memref<1xi32, #tpu.memory_space<smem>>) -> (i32, i32) {
    %c0_i32 = arith.constant 0 : i32
    %c0_i32_0 = arith.constant 0 : i32
    %c0_i32_1 = arith.constant 0 : i32
    return %c0_i32, %c0_i32_0 : i32, i32
  }
  func.func @transform_3(%arg0: i32, %arg1: memref<1xi32, #tpu.memory_space<smem>>) -> (i32, i32) {
    %c0_i32 = arith.constant 0 : i32
    %c0_i32_0 = arith.constant 0 : i32
    %c0_i32_1 = arith.constant 0 : i32
    return %c0_i32, %c0_i32_0 : i32, i32
  }
  func.func @transform_4(%arg0: i32, %arg1: memref<1xi32, #tpu.memory_space<smem>>) -> (i32, i32) {
    %c0_i32 = arith.constant 0 : i32
    %c0_i32_0 = arith.constant 0 : i32
    return %arg0, %c0_i32 : i32, i32
  }
}

</mosaic_0001>

<llo_original>
// kernel: tpu_custom_call.1
$region0: #{tpu_custom_call.1}
  #allocation0 [shape = 'u32[]', space=smem, size = 0x4, offset = 0x4, fixed_abs, tag = 'smem constant byte address 0x4 - core index']
  #allocation1 [shape = 'u32[144,128]{1,0:T(1,128)}', space=vmem, size = 0x12000, scoped, tag = 'internal scratch']
  #allocation2 [shape = 's32[1]{0}', space=sflag, size = 0x4, scoped, tag = 'scoped memory for tpu_custom_call.1']
  #allocation3 [shape = 's32[1]{0:T(128)S(6)}', space=smem, size = 0x200, scoped, tag = 'prefetched SMEM operand 0']
  %s0 = inlined_call_operand.<no memory space> [shape: s32[1], index: 0, kind: input, shape index: {}]
  %s1 = inlined_call_operand.hbm [shape: f32[16,32], index: 1, kind: input, shape index: {}]
  %s2 = inlined_call_operand.hbm [shape: f32[16,32], index: 2, kind: input, shape index: {}]
  %s3 = inlined_call_operand.vmem [shape: f32[1,32], index: 3, kind: input, shape index: {}]
  %s4 = inlined_call_operand.vmem [shape: f32[1,32], index: 4, kind: input, shape index: {}]
  %s5 = inlined_call_operand.hbm [shape: f32[16,32], index: 5, kind: output, shape index: {}]
  %s6 = sld [smem:[#allocation0]]
  $region34: #{tpu_custom_call.1} parent=0
    _
  %s8 = ssub.s32 1, %s6
  %s9 = scalar_select 0, %s8, %s6
  %10 = sst [smem:[#allocation3]] %s0
  $region1: #{tpu_custom_call.1} parent=0
    #allocation4 [shape = 'u8[8192]{0}', space=vmem, size = 0x2000, scoped, tag = 'input window, operand 1, single buffered']
    #allocation5 [shape = 's32[1]{0}', space=sflag, size = 0x4, scoped, tag = 'scoped memory for tpu_custom_call.1']
    #allocation6 [shape = 's32[1]{0}', space=sflag, size = 0x4, scoped, tag = 'scoped memory for tpu_custom_call.1']
    #allocation7 [shape = 'u8[8192]{0}', space=vmem, size = 0x2000, scoped, tag = 'input window, operand 2, single buffered']
    #allocation8 [shape = 's32[1]{0}', space=sflag, size = 0x4, scoped, tag = 'scoped memory for tpu_custom_call.1']
    #allocation9 [shape = 'u8[8192]{0}', space=vmem, size = 0x2000, scoped, tag = 'output window, operand 0, single buffered']
    %11 = vsyncpa [#allocation5], 0
    %12 = vsyncpa [#allocation8], 0
    %13 = vsyncpa [#allocation6], 0
    // Predicated region
    $region2: #{tpu_custom_call.1} parent=1 // pred_check
      _
    $region3: #{tpu_custom_call.1} parent=1 // pred_check_branch
      %15 = sbr.rel (0) target = $region5
    $region4: #{tpu_custom_call.1} parent=1 // pred_region
      %s17 = ssub.s32 256, 256
      %18 = vsyncadd [#allocation5], %s17
      %s19 = sshll.u32 [#allocation4], 4
      %s20 = int_to_ptr.vmem [resolvable:$true] %s19
      %25 = dma.hbm_to_vmem [thread:$0]  %s1, 256, %s20, [#allocation5], 128, 128, 8
    $region5: #{tpu_custom_call.1} parent=1 // pred_fallthru
      _
    // Predicated region
    $region6: #{tpu_custom_call.1} parent=1 // pred_check
      _
    $region7: #{tpu_custom_call.1} parent=1 // pred_check_branch
      %27 = sbr.rel (0) target = $region9
    $region8: #{tpu_custom_call.1} parent=1 // pred_region
      %s29 = ssub.s32 256, 256
      %30 = vsyncadd [#allocation8], %s29
      %s31 = sshll.u32 [#allocation7], 4
      %s32 = int_to_ptr.vmem [resolvable:$true] %s31
      %37 = dma.hbm_to_vmem [thread:$0]  %s2, 256, %s32, [#allocation8], 128, 128, 8
    $region9: #{tpu_custom_call.1} parent=1 // pred_fallthru
      _
    // Predicated region
    $region10: #{tpu_custom_call.1} parent=1 // pred_check
      _
    $region11: #{tpu_custom_call.1} parent=1 // pred_check_branch
      %39 = sbr.rel (0) target = $region13
    $region12: #{tpu_custom_call.1} parent=1 // pred_region
      _
    $region13: #{tpu_custom_call.1} parent=1 // pred_fallthru
      _
    // Predicated region
    $region14: #{tpu_custom_call.1} parent=1 // pred_check
      _
    $region15: #{tpu_custom_call.1} parent=1 // pred_check_branch
      %41 = sbr.rel (0) target = $region17
    $region16: #{tpu_custom_call.1} parent=1 // pred_region
      _
    $region17: #{tpu_custom_call.1} parent=1 // pred_fallthru
      _
    // Predicated region
    $region18: #{tpu_custom_call.1} parent=1 // pred_check
      _
    $region19: #{tpu_custom_call.1} parent=1 // pred_check_branch
      %43 = sbr.rel (0) target = $region21
    $region20: #{tpu_custom_call.1} parent=1 // pred_region
      %44 = dma.done [#allocation5], 256
    $region21: #{tpu_custom_call.1} parent=1 // pred_fallthru
      _
    // Predicated region
    $region22: #{tpu_custom_call.1} parent=1 // pred_check
      _
    $region23: #{tpu_custom_call.1} parent=1 // pred_check_branch
      %46 = sbr.rel (0) target = $region25
    $region24: #{tpu_custom_call.1} parent=1 // pred_region
      %47 = dma.done [#allocation8], 256
    $region25: #{tpu_custom_call.1} parent=1 // pred_fallthru
      _
    %v48 = vld [vmem:[#allocation4] sm:$0xff]
    %v49 = vld [vmem:[#allocation4 + $0x8] sm:$0xff]
    %v50 = vld [vmem:[#allocation7] sm:$0xff]
    %v51 = vld [vmem:[#allocation7 + $0x8] sm:$0xff]
    %v52 = vadd.f32 %v48, %v50
    %v53 = vadd.f32 %v49, %v51
    %vm54 = vcmask 261120
    %v55 = vsel %vm54, %v52, 0.0
    %56 = vadd.xlane.f32.xlu0 %v55
    %v57 = vpop.xlane.xlu0 %56
    %v58 = vsel %vm54, %v53, 0.0
    %59 = vadd.xlane.f32.xlu0 %v58
    %v60 = vpop.xlane.xlu0 %59
    %v61 = vmul.f32 %v52, %v52
    %v62 = vmul.f32 %v53, %v53
    %v63 = vsel %vm54, %v61, 0.0
    %64 = vadd.xlane.f32.xlu0 %v63
    %v65 = vpop.xlane.xlu0 %64
    %v66 = vsel %vm54, %v62, 0.0
    %67 = vadd.xlane.f32.xlu0 %v66
    %v68 = vpop.xlane.xlu0 %67
    %v69 = vmul.f32 %v57, 0.03125
    %v70 = vmul.f32 %v60, 0.03125
    %v71 = vmul.f32 %v65, 0.03125
    %v72 = vmul.f32 %v68, 0.03125
    %v73 = vmul.f32 %v69, %v69
    %v74 = vmul.f32 %v70, %v70
    %v75 = vsub.f32 %v71, %v73
    %v76 = vsub.f32 %v72, %v74
    %v77 = vmax.f32 %v75, 0.0
    %v78 = vmax.f32 %v76, 0.0
    %v79 = vadd.f32 %v77, 1e-05
    %v80 = vadd.f32 %v78, 1e-05
    %v81 = vrsqrt.pop %v79
    %v82 = vrsqrt.pop %v80
    %v83 = vld [vmem:[%s3] sm:$0x1]
    %v84 = vld [vmem:[%s4] sm:$0x1]
    %v85 = vsub.f32 %v52, %v69
    %v86 = vsub.f32 %v53, %v70
    %v88 = vlaneseq
    %v89 = vshrl.u32 %v88, 7
    %v90 = vsub.s32 0, %v89
    %v91 = vrot.slane %v83, %v90
    %v93 = vmul.f32 %v81, %v91
    %v94 = vmul.f32 %v82, %v91
    %v95 = vmul.f32 %v85, %v93
    %v96 = vmul.f32 %v86, %v94
    %v98 = vlaneseq
    %v99 = vshrl.u32 %v98, 7
    %v100 = vsub.s32 0, %v99
    %v101 = vrot.slane %v84, %v100
    %v103 = vadd.f32 %v95, %v101
    %v104 = vadd.f32 %v96, %v101
    %105 = vst.msk [vmem:[#allocation9] sm:$0xff] %vm54, %v103
    %106 = vst.msk [vmem:[#allocation9 + $0x8] sm:$0xff] %vm54, %v104
    // Predicated region
    $region26: #{tpu_custom_call.1} parent=1 // pred_check
      _
    $region27: #{tpu_custom_call.1} parent=1 // pred_check_branch
      %108 = sbr.rel (0) target = $region29
    $region28: #{tpu_custom_call.1} parent=1 // pred_region
      %s110 = ssub.s32 256, 256
      %111 = vsyncadd [#allocation6], %s110
      %s112 = sshll.u32 [#allocation9], 4
      %s113 = int_to_ptr.vmem [resolvable:$true] %s112
      %118 = dma.vmem_to_hbm [thread:$0]  %s113, 256, %s5, [#allocation6], 128, 128, 8
    $region29: #{tpu_custom_call.1} parent=1 // pred_fallthru
      _
    // Predicated region
    $region30: #{tpu_custom_call.1} parent=1 // pred_check
      _
    $region31: #{tpu_custom_call.1} parent=1 // pred_check_branch
      %120 = sbr.rel (0) target = $region33
    $region32: #{tpu_custom_call.1} parent=1 // pred_region
      %121 = dma.done [#allocation6], 256
    $region33: #{tpu_custom_call.1} parent=1 // pred_fallthru
      _
    %122 = vsyncpa [#allocation5], 1
    %123 = vsyncpa [#allocation8], 1
    %124 = vsyncpa [#allocation6], 1

</llo_original>
